<compile_context>
chip_gen: v5e
topology: v5e:2x2
jax: 0.10.0
libtpu: 0.0.40
codegen_flags: <defaults>
</compile_context>

<pallas_src>
import jax
import jax.numpy as jnp
from jax.experimental import pallas as pl
from jax.experimental.pallas import tpu as pltpu


# Max rows per grid step.  With the lane-dense (2, tile_b) x block the per-step
# VMEM working set at 16384 rows is ~15-18 MiB (layer-1 f32 temporaries
# dominate), well inside the explicit 40 MiB scoped limit set below on every
# generation (v5e/v6e: 128 MiB physical, v7x: 64 MiB physical per TC).
TILE_B = 16384
_ROW_ALIGN = 512  # batch-padding granularity (multiple of 128 lanes)


def _round_up(n, m):
    return ((n + m - 1) // m) * m


def _choose_tile(batch, tile_max=TILE_B):
    """Adaptive tile: don't pad tiny batches to a full tile, and prefer >= 2
    grid steps (v7x dual-TensorCore sharding) when the batch is big enough."""
    if batch >= 2 * _ROW_ALIGN:
        return min(tile_max, _round_up(-(-batch // 2), _ROW_ALIGN))
    return _round_up(max(batch, 1), _ROW_ALIGN)


def mlp_kernel(x_ref, w1_ref, b1_ref, w2_ref, b2_ref, w3t_ref, b3_ref, o_ref):
    # x_ref: (2, TB) f32, lane-dense.
    x0 = x_ref[0:1, :]                              # (1, TB)
    x1 = x_ref[1:2, :]                              # (1, TB)

    # ---- Layer 1: Linear(2, 64) + ReLU as VPU broadcast-FMA ----------------
    # h1[j, b] = relu(W1[j,0]*x[b,0] + W1[j,1]*x[b,1] + b1[j])   -> (64, TB)
    h1 = w1_ref[:, 0:1] * x0 + w1_ref[:, 1:2] * x1 + b1_ref[...]
    h1 = jnp.maximum(h1, 0.0)

    # ---- Layer 2: Linear(64, 32) + ReLU on the MXU (bf16 in, f32 acc) ------
    h2 = jnp.dot(w2_ref[...], h1.astype(jnp.bfloat16),
                 preferred_element_type=jnp.float32)      # (32, TB) f32
    h2 = jnp.maximum(h2 + b2_ref[...], 0.0)

    # ---- Layer 3: Linear(32, 1) -> lane-dense (1, TB) output row -----------
    # Output width 1: VPU multiply + sublane (XLU) reduction, keeps MXU free.
    out = jnp.sum(h2 * w3t_ref[...], axis=0, keepdims=True) + b3_ref[...]
    o_ref[...] = out.astype(o_ref.dtype)


def mlp_forward(x, params, tile_max=TILE_B):
    """x: (B, 2) float32 -> (B, 1) float32."""
    w1, b1, w2, b2, w3t, b3 = params
    B = x.shape[0]
    tile_b = _choose_tile(B, tile_max)
    n_tiles = pl.cdiv(B, tile_b)
    b_pad = n_tiles * tile_b

    # Transpose once in the wrapper -> lane-dense (2, b_pad) feature-major x.
    xt = x.T
    if b_pad != B:
        xt = jnp.pad(xt, ((0, 0), (0, b_pad - B)))

    # MXU operand of layer 2 in bf16 (f32 accumulate); everything else f32.
    w2_bf = w2.astype(jnp.bfloat16)

    resident = lambda a: pl.BlockSpec(a.shape, lambda i: (0,) * a.ndim)

    flops = 2 * B * (2 * 64 + 64 * 32 + 32 * 1)
    bytes_accessed = B * (2 * 4 + 4) + 4 * (64 * 2 + 64 + 32 * 64 + 32 + 32 + 1)

    out_t = pl.pallas_call(
        mlp_kernel,
        out_shape=jax.ShapeDtypeStruct((1, b_pad), jnp.float32),
        grid=(n_tiles,),
        in_specs=[
            pl.BlockSpec((2, tile_b), lambda i: (0, i)),   # x: streamed per tile
            resident(w1), resident(b1),                    # params: VMEM-resident
            resident(w2_bf), resident(b2),
            resident(w3t), resident(b3),
        ],
        out_specs=pl.BlockSpec((1, tile_b), lambda i: (0, i)),
        compiler_params=pltpu.CompilerParams(
            dimension_semantics=("parallel",),             # v7x: batch over both TCs
            vmem_limit_bytes=40 * 1024 * 1024),
        cost_estimate=pl.CostEstimate(
            flops=flops, transcendentals=0, bytes_accessed=bytes_accessed),
    )(xt, w1, b1, w2_bf, b2, w3t, b3)

    # (1, b_pad) lane-dense slab -> (B, 1): pure wrapper-side layout plumbing.
    return out_t.reshape(b_pad, 1)[:B]


def init_params(key):
    """PyTorch nn.Linear default init: U(-1/sqrt(fan_in), +1/sqrt(fan_in)).

    Weights kept in PyTorch (out_features, in_features) orientation (what the
    feature-major kernel consumes); biases stored as (out_features, 1) columns;
    W3 stored transposed as (32, 1) for the layer-3 VPU reduction."""
    layer_shapes = [(64, 2), (32, 64), (1, 32)]     # (out_features, in_features)
    raw = []
    for out_f, in_f in layer_shapes:
        key, kw, kb = jax.random.split(key, 3)
        bound = 1.0 / (in_f ** 0.5)
        w = jax.random.uniform(kw, (out_f, in_f), jnp.float32, -bound, bound)
        b = jax.random.uniform(kb, (out_f, 1), jnp.float32, -bound, bound)
        raw += [w, b]
    w1, b1, w2, b2, w3, b3 = raw
    return (w1, b1, w2, b2, w3.T, b3)               # W3 -> (32, 1)


def reference_forward(x, params):
    """Pure-JAX batch-major f32 reference (matches the PyTorch module)."""
    w1, b1, w2, b2, w3t, b3 = params
    h1 = jnp.maximum(x @ w1.T + b1.T, 0.0)
    h2 = jnp.maximum(h1 @ w2.T + b2.T, 0.0)
    return h2 @ w3t + b3.T


if __name__ == "__main__":
    key = jax.random.PRNGKey(0)
    key, kx = jax.random.split(key)

    B = 8                                           # small smoke-test batch
    x = jax.random.normal(kx, (B, 2), jnp.float32)
    params = init_params(key)

    out = jax.block_until_ready(mlp_forward(x, params))
    ref = reference_forward(x, params)

    assert out.shape == (B, 1), out.shape
    # Layer-2 MXU operands are bf16 (f32 accumulate), so compare at ~1e-2.
    assert jnp.allclose(out, ref, atol=1e-2, rtol=1e-2), (out, ref)

    print("KERNEL_OK")
</pallas_src>

<mosaic_0001>
module attributes {stable_mosaic.version = 11 : i64} {
  func.func @mlp_kernel(%arg0: i32, %arg1: memref<2x512xf32, #tpu.memory_space<vmem>>, %arg2: memref<64x2xf32, #tpu.memory_space<vmem>>, %arg3: memref<64x1xf32, #tpu.memory_space<vmem>>, %arg4: memref<32x64xbf16, #tpu.memory_space<vmem>>, %arg5: memref<32x1xf32, #tpu.memory_space<vmem>>, %arg6: memref<32x1xf32, #tpu.memory_space<vmem>>, %arg7: memref<1x1xf32, #tpu.memory_space<vmem>>, %arg8: memref<1x512xf32, #tpu.memory_space<vmem>>) attributes {dimension_semantics = [#tpu.dimension_semantics<parallel>], iteration_bounds = array<i64: 1>, scalar_prefetch = 0 : i64, scratch_operands = 0 : i64, tpu.core_type = #tpu.core_type<tc>, window_params = [{transform_indices = @transform_0, window_bounds = array<i64: 2, 512>}, {pipeline_mode = #tpu.pipeline_mode<synchronous>, transform_indices = @transform_1, window_bounds = array<i64: 64, 2>}, {pipeline_mode = #tpu.pipeline_mode<synchronous>, transform_indices = @transform_2, window_bounds = array<i64: 64, 1>}, {pipeline_mode = #tpu.pipeline_mode<synchronous>, transform_indices = @transform_3, window_bounds = array<i64: 32, 64>}, {pipeline_mode = #tpu.pipeline_mode<synchronous>, transform_indices = @transform_4, window_bounds = array<i64: 32, 1>}, {pipeline_mode = #tpu.pipeline_mode<synchronous>, transform_indices = @transform_5, window_bounds = array<i64: 32, 1>}, {pipeline_mode = #tpu.pipeline_mode<synchronous>, transform_indices = @transform_6, window_bounds = array<i64: 1, 1>}, {transform_indices = @transform_7, window_bounds = array<i64: 1, 512>}]} {
    %c0 = arith.constant 0 : index
    %c0_0 = arith.constant 0 : index
    %0 = vector.load %arg1[%c0, %c0_0] : memref<2x512xf32, #tpu.memory_space<vmem>>, vector<1x512xf32>
    %c1 = arith.constant 1 : index
    %c0_1 = arith.constant 0 : index
    %1 = vector.load %arg1[%c1, %c0_1] : memref<2x512xf32, #tpu.memory_space<vmem>>, vector<1x512xf32>
    %c0_2 = arith.constant 0 : index
    %c0_3 = arith.constant 0 : index
    %2 = vector.load %arg2[%c0_2, %c0_3] : memref<64x2xf32, #tpu.memory_space<vmem>>, vector<64x1xf32>
    %3 = vector.broadcast %2 : vector<64x1xf32> to vector<64x512xf32>
    %4 = vector.broadcast %0 : vector<1x512xf32> to vector<64x512xf32>
    %5 = arith.mulf %3, %4 : vector<64x512xf32>
    %c0_4 = arith.constant 0 : index
    %c1_5 = arith.constant 1 : index
    %6 = vector.load %arg2[%c0_4, %c1_5] : memref<64x2xf32, #tpu.memory_space<vmem>>, vector<64x1xf32>
    %7 = vector.broadcast %6 : vector<64x1xf32> to vector<64x512xf32>
    %8 = vector.broadcast %1 : vector<1x512xf32> to vector<64x512xf32>
    %9 = arith.mulf %7, %8 : vector<64x512xf32>
    %10 = arith.addf %5, %9 : vector<64x512xf32>
    %c0_6 = arith.constant 0 : index
    %c0_7 = arith.constant 0 : index
    %11 = vector.load %arg3[%c0_6, %c0_7] : memref<64x1xf32, #tpu.memory_space<vmem>>, vector<64x1xf32>
    %12 = vector.broadcast %11 : vector<64x1xf32> to vector<64x512xf32>
    %13 = arith.addf %10, %12 : vector<64x512xf32>
    %cst = arith.constant 0.000000e+00 : f32
    %14 = vector.broadcast %cst : f32 to vector<64x512xf32>
    %15 = arith.maximumf %13, %14 : vector<64x512xf32>
    %c0_8 = arith.constant 0 : index
    %c0_9 = arith.constant 0 : index
    %16 = vector.load %arg4[%c0_8, %c0_9] : memref<32x64xbf16, #tpu.memory_space<vmem>>, vector<32x64xbf16>
    %17 = arith.truncf %15 : vector<64x512xf32> to vector<64x512xbf16>
    %cst_10 = arith.constant dense<0.000000e+00> : vector<32x512xf32>
    %18 = tpu.matmul %16, %17, %cst_10 {dimension_numbers = #tpu.dot_dimension_numbers<[1], [0], [0], [1], [0, 0, 1, 1], [], []>} : vector<32x64xbf16>, vector<64x512xbf16>, vector<32x512xf32> -> vector<32x512xf32>
    %c0_11 = arith.constant 0 : index
    %c0_12 = arith.constant 0 : index
    %19 = vector.load %arg5[%c0_11, %c0_12] : memref<32x1xf32, #tpu.memory_space<vmem>>, vector<32x1xf32>
    %20 = vector.broadcast %19 : vector<32x1xf32> to vector<32x512xf32>
    %21 = arith.addf %18, %20 : vector<32x512xf32>
    %cst_13 = arith.constant 0.000000e+00 : f32
    %22 = vector.broadcast %cst_13 : f32 to vector<32x512xf32>
    %23 = arith.maximumf %21, %22 : vector<32x512xf32>
    %c0_14 = arith.constant 0 : index
    %c0_15 = arith.constant 0 : index
    %24 = vector.load %arg6[%c0_14, %c0_15] : memref<32x1xf32, #tpu.memory_space<vmem>>, vector<32x1xf32>
    %25 = vector.broadcast %24 : vector<32x1xf32> to vector<32x512xf32>
    %26 = arith.mulf %23, %25 : vector<32x512xf32>
    %cst_16 = arith.constant dense<0.000000e+00> : vector<512xf32>
    %27 = vector.multi_reduction <add>, %26, %cst_16 [0] : vector<32x512xf32> to vector<512xf32>
    %28 = vector.shape_cast %27 : vector<512xf32> to vector<1x512xf32>
    %c0_17 = arith.constant 0 : index
    %c0_18 = arith.constant 0 : index
    %29 = vector.load %arg7[%c0_17, %c0_18] : memref<1x1xf32, #tpu.memory_space<vmem>>, vector<1x1xf32>
    %30 = vector.broadcast %29 : vector<1x1xf32> to vector<1x512xf32>
    %31 = arith.addf %28, %30 : vector<1x512xf32>
    %c0_19 = arith.constant 0 : index
    %c0_20 = arith.constant 0 : index
    %32 = vector.load %arg8[%c0_19, %c0_20] : memref<1x512xf32, #tpu.memory_space<vmem>>, vector<1x512xf32>
    tpu.vector_store %arg8[%c0_19, %c0_20], %31 {strides = array<i32>} : memref<1x512xf32, #tpu.memory_space<vmem>>, vector<1x512xf32>,
    return
  }
  func.func @transform_0(%arg0: i32) -> (i32, i32) {
    %c0_i32 = arith.constant 0 : i32
    %c0_i32_0 = arith.constant 0 : i32
    return %c0_i32, %arg0 : i32, i32
  }
  func.func @transform_1(%arg0: i32) -> (i32, i32) {
    %c0_i32 = arith.constant 0 : i32
    %c0_i32_0 = arith.constant 0 : i32
    %c0_i32_1 = arith.constant 0 : i32
    return %c0_i32, %c0_i32_0 : i32, i32
  }
  func.func @transform_2(%arg0: i32) -> (i32, i32) {
    %c0_i32 = arith.constant 0 : i32
    %c0_i32_0 = arith.constant 0 : i32
    %c0_i32_1 = arith.constant 0 : i32
    return %c0_i32, %c0_i32_0 : i32, i32
  }
  func.func @transform_3(%arg0: i32) -> (i32, i32) {
    %c0_i32 = arith.constant 0 : i32
    %c0_i32_0 = arith.constant 0 : i32
    %c0_i32_1 = arith.constant 0 : i32
    return %c0_i32, %c0_i32_0 : i32, i32
  }
  func.func @transform_4(%arg0: i32) -> (i32, i32) {
    %c0_i32 = arith.constant 0 : i32
    %c0_i32_0 = arith.constant 0 : i32
    %c0_i32_1 = arith.constant 0 : i32
    return %c0_i32, %c0_i32_0 : i32, i32
  }
  func.func @transform_5(%arg0: i32) -> (i32, i32) {
    %c0_i32 = arith.constant 0 : i32
    %c0_i32_0 = arith.constant 0 : i32
    %c0_i32_1 = arith.constant 0 : i32
    return %c0_i32, %c0_i32_0 : i32, i32
  }
  func.func @transform_6(%arg0: i32) -> (i32, i32) {
    %c0_i32 = arith.constant 0 : i32
    %c0_i32_0 = arith.constant 0 : i32
    %c0_i32_1 = arith.constant 0 : i32
    return %c0_i32, %c0_i32_0 : i32, i32
  }
  func.func @transform_7(%arg0: i32) -> (i32, i32) {
    %c0_i32 = arith.constant 0 : i32
    %c0_i32_0 = arith.constant 0 : i32
    return %c0_i32, %arg0 : i32, i32
  }
}

</mosaic_0001>

<llo_original>
// kernel: tpu_custom_call.1
$region0: #{tpu_custom_call.1}
  #allocation0 [shape = 'u32[]', space=smem, size = 0x4, offset = 0x4, fixed_abs, tag = 'smem constant byte address 0x4 - core index']
  #allocation1 [shape = 'u32[72,128]{1,0:T(1,128)}', space=vmem, size = 0x9000, scoped, tag = 'internal scratch']
  #allocation2 [shape = 'f32[1,1]{1,0:T(1,128)S(1)}', space=vmem, size = 0x200, scoped, tag = 'scoped memory for tpu_custom_call.1']
  %s0 = inlined_call_operand.vmem [shape: f32[2,512], index: 0, kind: input, shape index: {}]
  %s1 = inlined_call_operand.vmem [shape: f32[64,2], index: 1, kind: input, shape index: {}]
  %s2 = inlined_call_operand.vmem [shape: f32[64,1], index: 2, kind: input, shape index: {}]
  %s3 = inlined_call_operand.vmem [shape: bf16[32,64], index: 3, kind: input, shape index: {}]
  %s4 = inlined_call_operand.vmem [shape: f32[32,1], index: 4, kind: input, shape index: {}]
  %s5 = inlined_call_operand.vmem [shape: f32[32,1], index: 5, kind: input, shape index: {}]
  %s6 = inlined_call_operand.<no memory space> [shape: f32[1,1], index: 6, kind: input, shape index: {}]
  %s7 = inlined_call_operand.hbm [shape: f32[1,512], index: 7, kind: output, shape index: {}]
  %s8 = sld [smem:[#allocation0]]
  $region38: #{tpu_custom_call.1} parent=0
    _
  %s10 = ssub.s32 1, %s8
  %s11 = scalar_select 0, %s10, %s8
  %v12 = vstv %s6
  %13 = vst [vmem:[#allocation2] sm:$0x1] %v12
  $region1: #{tpu_custom_call.1} parent=0
    #allocation3 [shape = 'u8[2048]{0}', space=vmem, size = 0x800, scoped, tag = 'output window, operand 0, single buffered']
    #allocation4 [shape = 's32[1]{0}', space=sflag, size = 0x4, scoped, tag = 'scoped memory for tpu_custom_call.1']
    %14 = vsyncpa [#allocation4], 0
    // Predicated region
    $region2: #{tpu_custom_call.1} parent=1 // pred_check
      _
    $region3: #{tpu_custom_call.1} parent=1 // pred_check_branch
      %16 = sbr.rel (0) target = $region5
    $region4: #{tpu_custom_call.1} parent=1 // pred_region
      _
    $region5: #{tpu_custom_call.1} parent=1 // pred_fallthru
      _
    // Predicated region
    $region6: #{tpu_custom_call.1} parent=1 // pred_check
      _
    $region7: #{tpu_custom_call.1} parent=1 // pred_check_branch
      %18 = sbr.rel (0) target = $region9
    $region8: #{tpu_custom_call.1} parent=1 // pred_region
      _
    $region9: #{tpu_custom_call.1} parent=1 // pred_fallthru
      _
    // Predicated region
    $region10: #{tpu_custom_call.1} parent=1 // pred_check
      _
    $region11: #{tpu_custom_call.1} parent=1 // pred_check_branch
      %20 = sbr.rel (0) target = $region13
    $region12: #{tpu_custom_call.1} parent=1 // pred_region
      _
    $region13: #{tpu_custom_call.1} parent=1 // pred_fallthru
      _
    // Predicated region
    $region14: #{tpu_custom_call.1} parent=1 // pred_check
      _
    $region15: #{tpu_custom_call.1} parent=1 // pred_check_branch
      %22 = sbr.rel (0) target = $region17
    $region16: #{tpu_custom_call.1} parent=1 // pred_region
      _
    $region17: #{tpu_custom_call.1} parent=1 // pred_fallthru
      _
    // Predicated region
    $region18: #{tpu_custom_call.1} parent=1 // pred_check
      _
    $region19: #{tpu_custom_call.1} parent=1 // pred_check_branch
      %24 = sbr.rel (0) target = $region21
    $region20: #{tpu_custom_call.1} parent=1 // pred_region
      _
    $region21: #{tpu_custom_call.1} parent=1 // pred_fallthru
      _
    // Predicated region
    $region22: #{tpu_custom_call.1} parent=1 // pred_check
      _
    $region23: #{tpu_custom_call.1} parent=1 // pred_check_branch
      %26 = sbr.rel (0) target = $region25
    $region24: #{tpu_custom_call.1} parent=1 // pred_region
      _
    $region25: #{tpu_custom_call.1} parent=1 // pred_fallthru
      _
    // Predicated region
    $region26: #{tpu_custom_call.1} parent=1 // pred_check
      _
    $region27: #{tpu_custom_call.1} parent=1 // pred_check_branch
      %28 = sbr.rel (0) target = $region29
    $region28: #{tpu_custom_call.1} parent=1 // pred_region
      _
    $region29: #{tpu_custom_call.1} parent=1 // pred_fallthru
      _
    %v30 = vld [vmem:[%s0] ss:$2 sm:$0xf]
    %s31 = scalar_lea.vmem %s0, 1
    %v32 = vld [vmem:[%s31] ss:$2 sm:$0xf]
    %v33 = vld [vmem:[%s1] sm:$0xff]
    %v34 = vld [vmem:[%s1 + $0x8] sm:$0xff]
    %v35 = vld [vmem:[%s1 + $0x10] sm:$0xff]
    %v36 = vld [vmem:[%s1 + $0x18] sm:$0xff]
    %v37 = vld [vmem:[%s1 + $0x20] sm:$0xff]
    %v38 = vld [vmem:[%s1 + $0x28] sm:$0xff]
    %v39 = vld [vmem:[%s1 + $0x30] sm:$0xff]
    %v40 = vld [vmem:[%s1 + $0x38] sm:$0xff]
    %42 = vset.pattern.permute.xlu0 0
    %43 = vperm.xlu0 %42, %v33
    %v44 = vpop.permute.xlu0 %43
    %47 = vset.pattern.permute.xlu0 0
    %48 = vperm.xlu0 %47, %v34
    %v49 = vpop.permute.xlu0 %48
    %52 = vset.pattern.permute.xlu0 0
    %53 = vperm.xlu0 %52, %v35
    %v54 = vpop.permute.xlu0 %53
    %57 = vset.pattern.permute.xlu0 0
    %58 = vperm.xlu0 %57, %v36
    %v59 = vpop.permute.xlu0 %58
    %62 = vset.pattern.permute.xlu0 0
    %63 = vperm.xlu0 %62, %v37
    %v64 = vpop.permute.xlu0 %63
    %67 = vset.pattern.permute.xlu0 0
    %68 = vperm.xlu0 %67, %v38
    %v69 = vpop.permute.xlu0 %68
    %72 = vset.pattern.permute.xlu0 0
    %73 = vperm.xlu0 %72, %v39
    %v74 = vpop.permute.xlu0 %73
    %77 = vset.pattern.permute.xlu0 0
    %78 = vperm.xlu0 %77, %v40
    %v79 = vpop.permute.xlu0 %78
    %v82 = vperm.slane %v30, 0
    %v83 = vperm.slane %v30, 1
    %v84 = vperm.slane %v30, 2
    %v85 = vperm.slane %v30, 3
    %v90 = vmul.f32 %v44, %v82
    %v91 = vmul.f32 %v44, %v83
    %v92 = vmul.f32 %v44, %v84
    %v93 = vmul.f32 %v44, %v85
    %v94 = vmul.f32 %v49, %v82
    %v95 = vmul.f32 %v49, %v83
    %v96 = vmul.f32 %v49, %v84
    %v97 = vmul.f32 %v49, %v85
    %v98 = vmul.f32 %v54, %v82
    %v99 = vmul.f32 %v54, %v83
    %v100 = vmul.f32 %v54, %v84
    %v101 = vmul.f32 %v54, %v85
    %v102 = vmul.f32 %v59, %v82
    %v103 = vmul.f32 %v59, %v83
    %v104 = vmul.f32 %v59, %v84
    %v105 = vmul.f32 %v59, %v85
    %v106 = vmul.f32 %v64, %v82
    %v107 = vmul.f32 %v64, %v83
    %v108 = vmul.f32 %v64, %v84
    %v109 = vmul.f32 %v64, %v85
    %v110 = vmul.f32 %v69, %v82
    %v111 = vmul.f32 %v69, %v83
    %v112 = vmul.f32 %v69, %v84
    %v113 = vmul.f32 %v69, %v85
    %v114 = vmul.f32 %v74, %v82
    %v115 = vmul.f32 %v74, %v83
    %v116 = vmul.f32 %v74, %v84
    %v117 = vmul.f32 %v74, %v85
    %v118 = vmul.f32 %v79, %v82
    %v119 = vmul.f32 %v79, %v83
    %v120 = vmul.f32 %v79, %v84
    %v121 = vmul.f32 %v79, %v85
    %122 = vset.pattern.permute.xlu0 1
    %123 = vperm.xlu0 %122, %v33
    %v124 = vpop.permute.xlu0 %123
    %126 = vset.pattern.permute.xlu0 1
    %127 = vperm.xlu0 %126, %v34
    %v128 = vpop.permute.xlu0 %127
    %130 = vset.pattern.permute.xlu0 1
    %131 = vperm.xlu0 %130, %v35
    %v132 = vpop.permute.xlu0 %131
    %134 = vset.pattern.permute.xlu0 1
    %135 = vperm.xlu0 %134, %v36
    %v136 = vpop.permute.xlu0 %135
    %138 = vset.pattern.permute.xlu0 1
    %139 = vperm.xlu0 %138, %v37
    %v140 = vpop.permute.xlu0 %139
    %142 = vset.pattern.permute.xlu0 1
    %143 = vperm.xlu0 %142, %v38
    %v144 = vpop.permute.xlu0 %143
    %146 = vset.pattern.permute.xlu0 1
    %147 = vperm.xlu0 %146, %v39
    %v148 = vpop.permute.xlu0 %147
    %150 = vset.pattern.permute.xlu0 1
    %151 = vperm.xlu0 %150, %v40
    %v152 = vpop.permute.xlu0 %151
    %v155 = vperm.slane %v32, 0
    %v156 = vperm.slane %v32, 1
    %v157 = vperm.slane %v32, 2
    %v158 = vperm.slane %v32, 3
    %v163 = vmul.f32 %v124, %v155
    %v164 = vmul.f32 %v124, %v156
    %v165 = vmul.f32 %v124, %v157
    %v166 = vmul.f32 %v124, %v158
    %v167 = vmul.f32 %v128, %v155
    %v168 = vmul.f32 %v128, %v156
    %v169 = vmul.f32 %v128, %v157
    %v170 = vmul.f32 %v128, %v158
    %v171 = vmul.f32 %v132, %v155
    %v172 = vmul.f32 %v132, %v156
    %v173 = vmul.f32 %v132, %v157
    %v174 = vmul.f32 %v132, %v158
    %v175 = vmul.f32 %v136, %v155
    %v176 = vmul.f32 %v136, %v156
    %v177 = vmul.f32 %v136, %v157
    %v178 = vmul.f32 %v136, %v158
    %v179 = vmul.f32 %v140, %v155
    %v180 = vmul.f32 %v140, %v156
    %v181 = vmul.f32 %v140, %v157
    %v182 = vmul.f32 %v140, %v158
    %v183 = vmul.f32 %v144, %v155
    %v184 = vmul.f32 %v144, %v156
    %v185 = vmul.f32 %v144, %v157
    %v186 = vmul.f32 %v144, %v158
    %v187 = vmul.f32 %v148, %v155
    %v188 = vmul.f32 %v148, %v156
    %v189 = vmul.f32 %v148, %v157
    %v190 = vmul.f32 %v148, %v158
    %v191 = vmul.f32 %v152, %v155
    %v192 = vmul.f32 %v152, %v156
    %v193 = vmul.f32 %v152, %v157
    %v194 = vmul.f32 %v152, %v158
    %v195 = vadd.f32 %v90, %v163
    %v196 = vadd.f32 %v91, %v164
    %v197 = vadd.f32 %v92, %v165
    %v198 = vadd.f32 %v93, %v166
    %v199 = vadd.f32 %v94, %v167
    %v200 = vadd.f32 %v95, %v168
    %v201 = vadd.f32 %v96, %v169
    %v202 = vadd.f32 %v97, %v170
    %v203 = vadd.f32 %v98, %v171
    %v204 = vadd.f32 %v99, %v172
    %v205 = vadd.f32 %v100, %v173
    %v206 = vadd.f32 %v101, %v174
    %v207 = vadd.f32 %v102, %v175
    %v208 = vadd.f32 %v103, %v176
    %v209 = vadd.f32 %v104, %v177
    %v210 = vadd.f32 %v105, %v178
    %v211 = vadd.f32 %v106, %v179
    %v212 = vadd.f32 %v107, %v180
    %v213 = vadd.f32 %v108, %v181
    %v214 = vadd.f32 %v109, %v182
    %v215 = vadd.f32 %v110, %v183
    %v216 = vadd.f32 %v111, %v184
    %v217 = vadd.f32 %v112, %v185
    %v218 = vadd.f32 %v113, %v186
    %v219 = vadd.f32 %v114, %v187
    %v220 = vadd.f32 %v115, %v188
    %v221 = vadd.f32 %v116, %v189
    %v222 = vadd.f32 %v117, %v190
    %v223 = vadd.f32 %v118, %v191
    %v224 = vadd.f32 %v119, %v192
    %v225 = vadd.f32 %v120, %v193
    %v226 = vadd.f32 %v121, %v194
    %v227 = vld [vmem:[%s2] sm:$0xff]
    %v228 = vld [vmem:[%s2 + $0x8] sm:$0xff]
    %v229 = vld [vmem:[%s2 + $0x10] sm:$0xff]
    %v230 = vld [vmem:[%s2 + $0x18] sm:$0xff]
    %v231 = vld [vmem:[%s2 + $0x20] sm:$0xff]
    %v232 = vld [vmem:[%s2 + $0x28] sm:$0xff]
    %v233 = vld [vmem:[%s2 + $0x30] sm:$0xff]
    %v234 = vld [vmem:[%s2 + $0x38] sm:$0xff]
    %236 = vset.pattern.permute.xlu0 0
    %237 = vperm.xlu0 %236, %v227
    %v238 = vpop.permute.xlu0 %237
    %241 = vset.pattern.permute.xlu0 0
    %242 = vperm.xlu0 %241, %v228
    %v243 = vpop.permute.xlu0 %242
    %246 = vset.pattern.permute.xlu0 0
    %247 = vperm.xlu0 %246, %v229
    %v248 = vpop.permute.xlu0 %247
    %251 = vset.pattern.permute.xlu0 0
    %252 = vperm.xlu0 %251, %v230
    %v253 = vpop.permute.xlu0 %252
    %256 = vset.pattern.permute.xlu0 0
    %257 = vperm.xlu0 %256, %v231
    %v258 = vpop.permute.xlu0 %257
    %261 = vset.pattern.permute.xlu0 0
    %262 = vperm.xlu0 %261, %v232
    %v263 = vpop.permute.xlu0 %262
    %266 = vset.pattern.permute.xlu0 0
    %267 = vperm.xlu0 %266, %v233
    %v268 = vpop.permute.xlu0 %267
    %271 = vset.pattern.permute.xlu0 0
    %272 = vperm.xlu0 %271, %v234
    %v273 = vpop.permute.xlu0 %272
    %v275 = vadd.f32 %v195, %v238
    %v276 = vadd.f32 %v196, %v238
    %v277 = vadd.f32 %v197, %v238
    %v278 = vadd.f32 %v198, %v238
    %v279 = vadd.f32 %v199, %v243
    %v280 = vadd.f32 %v200, %v243
    %v281 = vadd.f32 %v201, %v243
    %v282 = vadd.f32 %v202, %v243
    %v283 = vadd.f32 %v203, %v248
    %v284 = vadd.f32 %v204, %v248
    %v285 = vadd.f32 %v205, %v248
    %v286 = vadd.f32 %v206, %v248
    %v287 = vadd.f32 %v207, %v253
    %v288 = vadd.f32 %v208, %v253
    %v289 = vadd.f32 %v209, %v253
    %v290 = vadd.f32 %v210, %v253
    %v291 = vadd.f32 %v211, %v258
    %v292 = vadd.f32 %v212, %v258
    %v293 = vadd.f32 %v213, %v258
    %v294 = vadd.f32 %v214, %v258
    %v295 = vadd.f32 %v215, %v263
    %v296 = vadd.f32 %v216, %v263
    %v297 = vadd.f32 %v217, %v263
    %v298 = vadd.f32 %v218, %v263
    %v299 = vadd.f32 %v219, %v268
    %v300 = vadd.f32 %v220, %v268
    %v301 = vadd.f32 %v221, %v268
    %v302 = vadd.f32 %v222, %v268
    %v303 = vadd.f32 %v223, %v273
    %v304 = vadd.f32 %v224, %v273
    %v305 = vadd.f32 %v225, %v273
    %v306 = vadd.f32 %v226, %v273
    %v307 = vmax.f32 %v275, 0.0
    %v308 = vmax.f32 %v276, 0.0
    %v309 = vmax.f32 %v277, 0.0
    %v310 = vmax.f32 %v278, 0.0
    %v311 = vmax.f32 %v279, 0.0
    %v312 = vmax.f32 %v280, 0.0
    %v313 = vmax.f32 %v281, 0.0
    %v314 = vmax.f32 %v282, 0.0
    %v315 = vmax.f32 %v283, 0.0
    %v316 = vmax.f32 %v284, 0.0
    %v317 = vmax.f32 %v285, 0.0
    %v318 = vmax.f32 %v286, 0.0
    %v319 = vmax.f32 %v287, 0.0
    %v320 = vmax.f32 %v288, 0.0
    %v321 = vmax.f32 %v289, 0.0
    %v322 = vmax.f32 %v290, 0.0
    %v323 = vmax.f32 %v291, 0.0
    %v324 = vmax.f32 %v292, 0.0
    %v325 = vmax.f32 %v293, 0.0
    %v326 = vmax.f32 %v294, 0.0
    %v327 = vmax.f32 %v295, 0.0
    %v328 = vmax.f32 %v296, 0.0
    %v329 = vmax.f32 %v297, 0.0
    %v330 = vmax.f32 %v298, 0.0
    %v331 = vmax.f32 %v299, 0.0
    %v332 = vmax.f32 %v300, 0.0
    %v333 = vmax.f32 %v301, 0.0
    %v334 = vmax.f32 %v302, 0.0
    %v335 = vmax.f32 %v303, 0.0
    %v336 = vmax.f32 %v304, 0.0
    %v337 = vmax.f32 %v305, 0.0
    %v338 = vmax.f32 %v306, 0.0
    %v339 = vld [vmem:[%s3] sm:$0xf]
    %v340 = vld [vmem:[%s3 + $0x4] sm:$0xf]
    %v341 = vld [vmem:[%s3 + $0x8] sm:$0xf]
    %v342 = vld [vmem:[%s3 + $0xc] sm:$0xf]
    %v343 = vpack.c.bf16 %v311, %v307
    %v344 = vpack.c.bf16 %v312, %v308
    %v345 = vpack.c.bf16 %v313, %v309
    %v346 = vpack.c.bf16 %v314, %v310
    %v347 = vpack.c.bf16 %v319, %v315
    %v348 = vpack.c.bf16 %v320, %v316
    %v349 = vpack.c.bf16 %v321, %v317
    %v350 = vpack.c.bf16 %v322, %v318
    %v351 = vpack.c.bf16 %v327, %v323
    %v352 = vpack.c.bf16 %v328, %v324
    %v353 = vpack.c.bf16 %v329, %v325
    %v354 = vpack.c.bf16 %v330, %v326
    %v355 = vpack.c.bf16 %v335, %v331
    %v356 = vpack.c.bf16 %v336, %v332
    %v357 = vpack.c.bf16 %v337, %v333
    %v358 = vpack.c.bf16 %v338, %v334
    %v359 = vld [vmem:[%s4] sm:$0xff]
    %v360 = vld [vmem:[%s4 + $0x8] sm:$0xff]
    %v361 = vld [vmem:[%s4 + $0x10] sm:$0xff]
    %v362 = vld [vmem:[%s4 + $0x18] sm:$0xff]
    %364 = vset.pattern.permute.xlu0 0
    %365 = vperm.xlu0 %364, %v359
    %v366 = vpop.permute.xlu0 %365
    %369 = vset.pattern.permute.xlu0 0
    %370 = vperm.xlu0 %369, %v360
    %v371 = vpop.permute.xlu0 %370
    %374 = vset.pattern.permute.xlu0 0
    %375 = vperm.xlu0 %374, %v361
    %v376 = vpop.permute.xlu0 %375
    %379 = vset.pattern.permute.xlu0 0
    %380 = vperm.xlu0 %379, %v362
    %v381 = vpop.permute.xlu0 %380
    %v387 = vunpack.c.l.b16 %v339
    %v388 = vunpack.c.l.b16 %v340
    %v389 = vunpack.c.l.b16 %v341
    %v390 = vunpack.c.l.b16 %v342
    %v391 = vpack.c.b16 %v388, %v387
    %v392 = vpack.c.b16 %v390, %v389
    %vm393 = vcmask 523264
    %v395 = vsel %vm393, %v391, 0
    %v398 = vsel %vm393, %v392, 0
    %400 = vmatpush.bf16.msra.mxu0 0
    %401 = vmatpush.bf16.msra.mxu0 0
    %402 = vmatpush.bf16.msra.mxu0 0
    %403 = vmatpush.bf16.msra.mxu0 0
    %404 = vmatpush.bf16.msra.mxu0 %v355
    %405 = vmatpush.bf16.msra.mxu0 %v351
    %406 = vmatpush.bf16.msra.mxu0 %v347
    %407 = vmatpush.bf16.msra.mxu0 %v343
    %408 = vmatmul.bf16.gmra.mxu0 %v395
    %v409 = vpop.f32.mrf.mxu0
    %v410 = vadd.f32 %v366, %v409
    %v411 = vpop.f32.mrf.mxu0
    %v412 = vadd.f32 %v371, %v411
    %413 = vmatmul.bf16.gmra.mxu0 %v398
    %v414 = vpop.f32.mrf.mxu0
    %v415 = vadd.f32 %v376, %v414
    %v416 = vpop.f32.mrf.mxu0
    %v417 = vadd.f32 %v381, %v416
    %418 = vdwg.mxu0
    %419 = vmatpush.bf16.msra.mxu0 0
    %420 = vmatpush.bf16.msra.mxu0 0
    %421 = vmatpush.bf16.msra.mxu0 0
    %422 = vmatpush.bf16.msra.mxu0 0
    %423 = vmatpush.bf16.msra.mxu0 %v356
    %424 = vmatpush.bf16.msra.mxu0 %v352
    %425 = vmatpush.bf16.msra.mxu0 %v348
    %426 = vmatpush.bf16.msra.mxu0 %v344
    %427 = vmatmul.bf16.gmra.mxu0 %v395
    %v428 = vpop.f32.mrf.mxu0
    %v429 = vadd.f32 %v366, %v428
    %v430 = vpop.f32.mrf.mxu0
    %v431 = vadd.f32 %v371, %v430
    %432 = vmatmul.bf16.gmra.mxu0 %v398
    %v433 = vpop.f32.mrf.mxu0
    %v434 = vadd.f32 %v376, %v433
    %v435 = vpop.f32.mrf.mxu0
    %v436 = vadd.f32 %v381, %v435
    %437 = vdwg.mxu0
    %438 = vmatpush.bf16.msra.mxu0 0
    %439 = vmatpush.bf16.msra.mxu0 0
    %440 = vmatpush.bf16.msra.mxu0 0
    %441 = vmatpush.bf16.msra.mxu0 0
    %442 = vmatpush.bf16.msra.mxu0 %v357
    %443 = vmatpush.bf16.msra.mxu0 %v353
    %444 = vmatpush.bf16.msra.mxu0 %v349
    %445 = vmatpush.bf16.msra.mxu0 %v345
    %446 = vmatmul.bf16.gmra.mxu0 %v395
    %v447 = vpop.f32.mrf.mxu0
    %v448 = vadd.f32 %v366, %v447
    %v449 = vpop.f32.mrf.mxu0
    %v450 = vadd.f32 %v371, %v449
    %451 = vmatmul.bf16.gmra.mxu0 %v398
    %v452 = vpop.f32.mrf.mxu0
    %v453 = vadd.f32 %v376, %v452
    %v454 = vpop.f32.mrf.mxu0
    %v455 = vadd.f32 %v381, %v454
    %456 = vdwg.mxu0
    %457 = vmatpush.bf16.msra.mxu0 0
    %458 = vmatpush.bf16.msra.mxu0 0
    %459 = vmatpush.bf16.msra.mxu0 0
    %460 = vmatpush.bf16.msra.mxu0 0
    %461 = vmatpush.bf16.msra.mxu0 %v358
    %462 = vmatpush.bf16.msra.mxu0 %v354
    %463 = vmatpush.bf16.msra.mxu0 %v350
    %464 = vmatpush.bf16.msra.mxu0 %v346
    %465 = vmatmul.bf16.gmra.mxu0 %v395
    %v466 = vpop.f32.mrf.mxu0
    %v467 = vadd.f32 %v366, %v466
    %v468 = vpop.f32.mrf.mxu0
    %v469 = vadd.f32 %v371, %v468
    %470 = vmatmul.bf16.gmra.mxu0 %v398
    %v471 = vpop.f32.mrf.mxu0
    %v472 = vadd.f32 %v376, %v471
    %v473 = vpop.f32.mrf.mxu0
    %v474 = vadd.f32 %v381, %v473
    %475 = vdwg.mxu0
    %v476 = vmax.f32 %v410, 0.0
    %v477 = vmax.f32 %v429, 0.0
    %v478 = vmax.f32 %v448, 0.0
    %v479 = vmax.f32 %v467, 0.0
    %v480 = vmax.f32 %v412, 0.0
    %v481 = vmax.f32 %v431, 0.0
    %v482 = vmax.f32 %v450, 0.0
    %v483 = vmax.f32 %v469, 0.0
    %v484 = vmax.f32 %v415, 0.0
    %v485 = vmax.f32 %v434, 0.0
    %v486 = vmax.f32 %v453, 0.0
    %v487 = vmax.f32 %v472, 0.0
    %v488 = vmax.f32 %v417, 0.0
    %v489 = vmax.f32 %v436, 0.0
    %v490 = vmax.f32 %v455, 0.0
    %v491 = vmax.f32 %v474, 0.0
    %v492 = vld [vmem:[%s5] sm:$0xff]
    %v493 = vld [vmem:[%s5 + $0x8] sm:$0xff]
    %v494 = vld [vmem:[%s5 + $0x10] sm:$0xff]
    %v495 = vld [vmem:[%s5 + $0x18] sm:$0xff]
    %497 = vset.pattern.permute.xlu0 0
    %498 = vperm.xlu0 %497, %v492
    %v499 = vpop.permute.xlu0 %498
    %502 = vset.pattern.permute.xlu0 0
    %503 = vperm.xlu0 %502, %v493
    %v504 = vpop.permute.xlu0 %503
    %507 = vset.pattern.permute.xlu0 0
    %508 = vperm.xlu0 %507, %v494
    %v509 = vpop.permute.xlu0 %508
    %512 = vset.pattern.permute.xlu0 0
    %513 = vperm.xlu0 %512, %v495
    %v514 = vpop.permute.xlu0 %513
    %v516 = vmul.f32 %v476, %v499
    %v517 = vmul.f32 %v477, %v499
    %v518 = vmul.f32 %v478, %v499
    %v519 = vmul.f32 %v479, %v499
    %v520 = vmul.f32 %v480, %v504
    %v521 = vmul.f32 %v481, %v504
    %v522 = vmul.f32 %v482, %v504
    %v523 = vmul.f32 %v483, %v504
    %v524 = vmul.f32 %v484, %v509
    %v525 = vmul.f32 %v485, %v509
    %v526 = vmul.f32 %v486, %v509
    %v527 = vmul.f32 %v487, %v509
    %v528 = vmul.f32 %v488, %v514
    %v529 = vmul.f32 %v489, %v514
    %v530 = vmul.f32 %v490, %v514
    %v531 = vmul.f32 %v491, %v514
    %v532 = vadd.f32 %v516, %v520
    %v533 = vadd.f32 %v532, %v524
    %v534 = vadd.f32 %v533, %v528
    %v535 = vrot.slane %v534, 4
    %v536 = vadd.f32 %v534, %v535
    %v537 = vrot.slane %v536, 2
    %v538 = vadd.f32 %v536, %v537
    %v539 = vrot.slane %v538, 1
    %v540 = vadd.f32 %v538, %v539
    %v541 = vadd.f32 %v517, %v521
    %v542 = vadd.f32 %v541, %v525
    %v543 = vadd.f32 %v542, %v529
    %v544 = vrot.slane %v543, 4
    %v545 = vadd.f32 %v543, %v544
    %v546 = vrot.slane %v545, 2
    %v547 = vadd.f32 %v545, %v546
    %v548 = vrot.slane %v547, 1
    %v549 = vadd.f32 %v547, %v548
    %v550 = vadd.f32 %v518, %v522
    %v551 = vadd.f32 %v550, %v526
    %v552 = vadd.f32 %v551, %v530
    %v553 = vrot.slane %v552, 4
    %v554 = vadd.f32 %v552, %v553
    %v555 = vrot.slane %v554, 2
    %v556 = vadd.f32 %v554, %v555
    %v557 = vrot.slane %v556, 1
    %v558 = vadd.f32 %v556, %v557
    %v559 = vadd.f32 %v519, %v523
    %v560 = vadd.f32 %v559, %v527
    %v561 = vadd.f32 %v560, %v531
    %v562 = vrot.slane %v561, 4
    %v563 = vadd.f32 %v561, %v562
    %v564 = vrot.slane %v563, 2
    %v565 = vadd.f32 %v563, %v564
    %v566 = vrot.slane %v565, 1
    %v567 = vadd.f32 %v565, %v566
    %v568 = vld [vmem:[#allocation2] sm:$0x1]
    %570 = vset.pattern.permute.xlu0 0
    %571 = vperm.xlu0 %570, %v568
    %v572 = vpop.permute.xlu0 %571
    %v574 = vperm.slane %v572, 0
    %v575 = vadd.f32 %v540, %v574
    %v576 = vadd.f32 %v549, %v574
    %v577 = vadd.f32 %v558, %v574
    %v578 = vadd.f32 %v567, %v574
    %v583 = vrot.slane %v576, 7
    %v584 = vrot.slane %v577, 6
    %v585 = vrot.slane %v578, 5
    %vm586 = vcmask 1040384
    %v587 = vsel %vm586, %v575, %v583
    %vm588 = vcmask 1042434
    %v589 = vsel %vm588, %v584, %v585
    %vm590 = vcmask 1041408
    %v591 = vsel %vm590, %v587, %v589
    %v593 = vlaneseq
    %vm594 = vcmp.ge.s32.totalorder %v593, 0
    %vm595 = vcmp.lt.s32.totalorder %v593, 512
    %vm596 = vmand %vm594, %vm595
    %597 = vst.msk [vmem:[#allocation3] sm:$0xf] %vm596, %v591
    // Predicated region
    $region30: #{tpu_custom_call.1} parent=1 // pred_check
      _
    $region31: #{tpu_custom_call.1} parent=1 // pred_check_branch
      %599 = sbr.rel (0) target = $region33
    $region32: #{tpu_custom_call.1} parent=1 // pred_region
      %601 = vsyncadd [#allocation4], 0
      %s603 = sshll.u32 [#allocation3], 4
      %s604 = int_to_ptr.vmem [resolvable:$true] %s603
      %s605 = sshll.u32 %s7, 4
      %s606 = int_to_ptr.hbm [resolvable:$true] %s605
      %608 = dma.vmem_to_hbm [thread:$0]  %s604, 64, %s606, [#allocation4]
    $region33: #{tpu_custom_call.1} parent=1 // pred_fallthru
      _
    // Predicated region
    $region34: #{tpu_custom_call.1} parent=1 // pred_check
      _
    $region35: #{tpu_custom_call.1} parent=1 // pred_check_branch
      %610 = sbr.rel (0) target = $region37
    $region36: #{tpu_custom_call.1} parent=1 // pred_region
      %612 = dma.done [#allocation4], 64
    $region37: #{tpu_custom_call.1} parent=1 // pred_fallthru
      _
    %613 = vsyncpa [#allocation4], 1

</llo_original>
